<compile_context>
chip_gen: v7x
topology: tpu7x:2x2x1
jax: 0.10.0
libtpu: 0.0.40
codegen_flags: <defaults>
</compile_context>

<pallas_src>
import functools

import jax
import jax.numpy as jnp
from jax.experimental import pallas as pl
from jax.experimental.pallas import tpu as pltpu

_IN_FEATURES = 5


def _linear_kernel(wb_ref, xT_ref, oT_ref):
    # wb_ref: SMEM (6,) f32   -> [w0, w1, w2, w3, w4, b]
    # xT_ref: VMEM (5, tile)  -> batch-on-lanes input tile (x.dtype)
    # oT_ref: VMEM (1, tile)  -> lane-dense output tile
    acc = jnp.full(oT_ref.shape, wb_ref[_IN_FEATURES], dtype=jnp.float32)  # bias
    for k in range(_IN_FEATURES):  # 5 scalar * vector FMAs on the VPU
        acc = acc + wb_ref[k] * xT_ref[k:k + 1, :].astype(jnp.float32)
    oT_ref[...] = acc.astype(oT_ref.dtype)


@functools.partial(jax.jit, static_argnames=("batch_tile",))
def llmodel4_forward(x, weight, bias, *, batch_tile=65536):
    """x: (B, 5).  weight: (1, 5) (PyTorch layout).  bias: (1,).  -> (B, 1)."""
    B, fin = x.shape
    assert fin == _IN_FEATURES

    # Pack W|b into one tiny SMEM-resident scalar array.
    wb = jnp.concatenate(
        [jnp.reshape(weight, (-1,)), jnp.reshape(bias, (-1,))]
    ).astype(jnp.float32)  # (6,)

    # --- Lane-tile selection ----------------------------------------------
    b128 = pl.cdiv(B, 128) * 128
    tile = min(int(batch_tile), b128)
    tile = max(128, (tile // 128) * 128)
    # For large batches keep >= 2 grid steps so both v7x TensorCores stream
    # HBM (the parallel grid axis is sharded across cores).
    if B >= 2 * 16384 and pl.cdiv(B, tile) < 2:
        tile = max(128, pl.cdiv(pl.cdiv(B, 2), 128) * 128)
    grid = (pl.cdiv(B, tile),)

    # Scoped-VMEM budget: double-buffered input tile + double-buffered output
    # tile + slack.  Keeps big tiles compiling on v5e's 16 MiB default while
    # staying under v7x's 64 MiB physical VMEM.
    elt = jnp.dtype(x.dtype).itemsize
    vmem_need = 2 * fin * tile * elt + 2 * tile * elt + (2 << 20)
    vmem_limit = int(min(max(vmem_need, 32 << 20), 64 << 20))

    # Layout plumbing only: feature-major view of x, same dtype, no zero-pad.
    # TODO(synk): accept x in feature-major (5, B) layout upstream to drop
    # this transpose entirely.
    xT = x.T  # (5, B)

    yT = pl.pallas_call(
        _linear_kernel,
        out_shape=jax.ShapeDtypeStruct((1, B), x.dtype),
        grid_spec=pltpu.PrefetchScalarGridSpec(
            num_scalar_prefetch=0,
            grid=grid,
            in_specs=[
                pl.BlockSpec(memory_space=pltpu.MemorySpace.SMEM),   # W|b scalars
                pl.BlockSpec((fin, tile), lambda i: (0, i)),         # x^T tile
            ],
            out_specs=pl.BlockSpec((1, tile), lambda i: (0, i)),     # y^T tile
        ),
        compiler_params=pltpu.CompilerParams(
            dimension_semantics=("parallel",),
            vmem_limit_bytes=vmem_limit,
        ),
    )(wb, xT)

    return yT.reshape(B, 1)  # (1,B) -> (B,1): free reshape under jit


if __name__ == "__main__":
    key = jax.random.PRNGKey(0)
    kx, kw, kb = jax.random.split(key, 3)

    B = 300  # deliberately not 128-aligned: exercises the ragged-final-block path
    x = jax.random.normal(kx, (B, _IN_FEATURES), jnp.float32)

    # PyTorch Linear default init: U(-1/sqrt(fan_in), 1/sqrt(fan_in))
    bound = 1.0 / jnp.sqrt(jnp.float32(_IN_FEATURES))
    weight = jax.random.uniform(kw, (1, _IN_FEATURES), jnp.float32, -bound, bound)
    bias = jax.random.uniform(kb, (1,), jnp.float32, -bound, bound)

    out = llmodel4_forward(x, weight, bias)
    out = jax.block_until_ready(out)

    ref = x @ weight.T + bias  # reference: y = x W^T + b
    assert out.shape == (B, 1)
    assert jnp.allclose(out, ref, atol=1e-5, rtol=1e-5), "mismatch vs reference"

    print("KERNEL_OK")
</pallas_src>

<mosaic_0001>
module attributes {stable_mosaic.version = 11 : i64} {
  func.func @_linear_kernel(%arg0: i32, %arg1: memref<6xf32, #tpu.memory_space<smem>>, %arg2: memref<5x384xf32, #tpu.memory_space<vmem>>, %arg3: memref<1x384xf32, #tpu.memory_space<vmem>>) attributes {dimension_semantics = [#tpu.dimension_semantics<parallel>], iteration_bounds = array<i64: 1>, scalar_prefetch = 0 : i64, scratch_operands = 0 : i64, tpu.core_type = #tpu.core_type<tc>, window_params = [{transform_indices = @transform_0, window_bounds = array<i64: 6>}, {transform_indices = @transform_1, window_bounds = array<i64: 5, 384>}, {transform_indices = @transform_2, window_bounds = array<i64: 1, 384>}]} {
    %c5 = arith.constant 5 : index
    %0 = memref.load %arg1[%c5] : memref<6xf32, #tpu.memory_space<smem>>
    %1 = vector.broadcast %0 : f32 to vector<1x384xf32>
    %c0 = arith.constant 0 : index
    %2 = memref.load %arg1[%c0] : memref<6xf32, #tpu.memory_space<smem>>
    %c0_0 = arith.constant 0 : index
    %c0_1 = arith.constant 0 : index
    %3 = vector.load %arg2[%c0_0, %c0_1] : memref<5x384xf32, #tpu.memory_space<vmem>>, vector<1x384xf32>
    %4 = vector.broadcast %2 : f32 to vector<1x384xf32>
    %5 = arith.mulf %4, %3 : vector<1x384xf32>
    %6 = arith.addf %1, %5 : vector<1x384xf32>
    %c1 = arith.constant 1 : index
    %7 = memref.load %arg1[%c1] : memref<6xf32, #tpu.memory_space<smem>>
    %c1_2 = arith.constant 1 : index
    %c0_3 = arith.constant 0 : index
    %8 = vector.load %arg2[%c1_2, %c0_3] : memref<5x384xf32, #tpu.memory_space<vmem>>, vector<1x384xf32>
    %9 = vector.broadcast %7 : f32 to vector<1x384xf32>
    %10 = arith.mulf %9, %8 : vector<1x384xf32>
    %11 = arith.addf %6, %10 : vector<1x384xf32>
    %c2 = arith.constant 2 : index
    %12 = memref.load %arg1[%c2] : memref<6xf32, #tpu.memory_space<smem>>
    %c2_4 = arith.constant 2 : index
    %c0_5 = arith.constant 0 : index
    %13 = vector.load %arg2[%c2_4, %c0_5] : memref<5x384xf32, #tpu.memory_space<vmem>>, vector<1x384xf32>
    %14 = vector.broadcast %12 : f32 to vector<1x384xf32>
    %15 = arith.mulf %14, %13 : vector<1x384xf32>
    %16 = arith.addf %11, %15 : vector<1x384xf32>
    %c3 = arith.constant 3 : index
    %17 = memref.load %arg1[%c3] : memref<6xf32, #tpu.memory_space<smem>>
    %c3_6 = arith.constant 3 : index
    %c0_7 = arith.constant 0 : index
    %18 = vector.load %arg2[%c3_6, %c0_7] : memref<5x384xf32, #tpu.memory_space<vmem>>, vector<1x384xf32>
    %19 = vector.broadcast %17 : f32 to vector<1x384xf32>
    %20 = arith.mulf %19, %18 : vector<1x384xf32>
    %21 = arith.addf %16, %20 : vector<1x384xf32>
    %c4 = arith.constant 4 : index
    %22 = memref.load %arg1[%c4] : memref<6xf32, #tpu.memory_space<smem>>
    %c4_8 = arith.constant 4 : index
    %c0_9 = arith.constant 0 : index
    %23 = vector.load %arg2[%c4_8, %c0_9] : memref<5x384xf32, #tpu.memory_space<vmem>>, vector<1x384xf32>
    %24 = vector.broadcast %22 : f32 to vector<1x384xf32>
    %25 = arith.mulf %24, %23 : vector<1x384xf32>
    %26 = arith.addf %21, %25 : vector<1x384xf32>
    %c0_10 = arith.constant 0 : index
    %c0_11 = arith.constant 0 : index
    %27 = vector.load %arg3[%c0_10, %c0_11] : memref<1x384xf32, #tpu.memory_space<vmem>>, vector<1x384xf32>
    tpu.vector_store %arg3[%c0_10, %c0_11], %26 {strides = array<i32>} : memref<1x384xf32, #tpu.memory_space<vmem>>, vector<1x384xf32>,
    return
  }
  func.func @transform_0(%arg0: i32) -> i32 {
    %c0_i32 = arith.constant 0 : i32
    %c0_i32_0 = arith.constant 0 : i32
    return %c0_i32 : i32
  }
  func.func @transform_1(%arg0: i32) -> (i32, i32) {
    %c0_i32 = arith.constant 0 : i32
    %c0_i32_0 = arith.constant 0 : i32
    return %c0_i32, %arg0 : i32, i32
  }
  func.func @transform_2(%arg0: i32) -> (i32, i32) {
    %c0_i32 = arith.constant 0 : i32
    %c0_i32_0 = arith.constant 0 : i32
    return %c0_i32, %arg0 : i32, i32
  }
}

</mosaic_0001>

<llo_original>
// kernel: llmodel4_forward.1
$region0: #{llmodel4_forward.1}
  #allocation0 [shape = 'u32[]', space=smem, size = 0x4, offset = 0x4, fixed_abs, tag = 'smem constant byte address 0x4 - core index']
  #allocation1 [shape = 'u32[144,128]{1,0:T(1,128)}', space=vmem, size = 0x12000, scoped, tag = 'internal scratch']
  %s0 = inlined_call_operand.vmem [shape: f32[6], index: 0, kind: input, shape index: {}]
  %s1 = inlined_call_operand.hbm [shape: f32[5,300], index: 1, kind: input, shape index: {}]
  %s2 = inlined_call_operand.hbm [shape: f32[1,300], index: 2, kind: output, shape index: {}]
  %s3 = sld [smem:[#allocation0]]
  $region26: #{llmodel4_forward.1} parent=0
    _
  %s5 = ssub.s32 1, %s3
  %s6 = scalar_select 0, %s5, %s3
  $region1: #{llmodel4_forward.1} parent=0
    #allocation2 [shape = 'u8[512]{0}', space=smem, size = 0x200, scoped, tag = 'input window, operand 0, single buffered']
    #allocation3 [shape = 's32[1]{0}', space=sflag, size = 0x4, scoped, tag = 'scoped memory for llmodel4_forward.1']
    #allocation4 [shape = 's32[1]{0}', space=sflag, size = 0x4, scoped, tag = 'scoped memory for llmodel4_forward.1']
    #allocation5 [shape = 's32[1]{0}', space=sflag, size = 0x4, scoped, tag = 'scoped memory for llmodel4_forward.1']
    #allocation6 [shape = 'u8[12288]{0}', space=vmem, size = 0x3000, scoped, tag = 'input window, operand 1, single buffered']
    #allocation7 [shape = 'u8[1536]{0}', space=vmem, size = 0x800, scoped, tag = 'output window, operand 0, single buffered']
    %7 = vsyncpa [#allocation5], 0
    %8 = vsyncpa [#allocation3], 0
    %9 = vsyncpa [#allocation4], 0
    // Predicated region
    $region2: #{llmodel4_forward.1} parent=1 // pred_check
      _
    $region3: #{llmodel4_forward.1} parent=1 // pred_check_branch
      %11 = sbr.rel (0) target = $region5
    $region4: #{llmodel4_forward.1} parent=1 // pred_region
      %s13 = ssub.s32 16, 16
      %14 = vsyncadd [#allocation5], %s13
      %s16 = sshll.u32 %s0, 4
      %s17 = int_to_ptr.vmem [resolvable:$true] %s16
      %19 = dma.vmem_to_smem %s17, 16, [#allocation2], [#allocation5]
    $region5: #{llmodel4_forward.1} parent=1 // pred_fallthru
      _
    // Predicated region
    $region6: #{llmodel4_forward.1} parent=1 // pred_check
      _
    $region7: #{llmodel4_forward.1} parent=1 // pred_check_branch
      %21 = sbr.rel (0) target = $region9
    $region8: #{llmodel4_forward.1} parent=1 // pred_region
      %s23 = ssub.s32 384, 384
      %24 = vsyncadd [#allocation3], %s23
      %s26 = sshll.u32 [#allocation6], 4
      %s27 = int_to_ptr.vmem [resolvable:$true] %s26
      %29 = dma.hbm_to_vmem [thread:$0]  %s1, 384, %s27, [#allocation3]
    $region9: #{llmodel4_forward.1} parent=1 // pred_fallthru
      _
    // Predicated region
    $region10: #{llmodel4_forward.1} parent=1 // pred_check
      _
    $region11: #{llmodel4_forward.1} parent=1 // pred_check_branch
      %31 = sbr.rel (0) target = $region13
    $region12: #{llmodel4_forward.1} parent=1 // pred_region
      %32 = dma.done [#allocation5], 16
    $region13: #{llmodel4_forward.1} parent=1 // pred_fallthru
      _
    // Predicated region
    $region14: #{llmodel4_forward.1} parent=1 // pred_check
      _
    $region15: #{llmodel4_forward.1} parent=1 // pred_check_branch
      %34 = sbr.rel (0) target = $region17
    $region16: #{llmodel4_forward.1} parent=1 // pred_region
      %35 = dma.done [#allocation3], 384
    $region17: #{llmodel4_forward.1} parent=1 // pred_fallthru
      _
    %36 = sfence
    %s37 = sld [smem:[#allocation2 + $0x5]]
    %v38 = vstv %s37
    %s39 = sld [smem:[#allocation2]]
    %v40 = vld [vmem:[#allocation6] ss:$8 sm:$0x7]
    %v41 = vstv %s39
    %v42 = vmul.f32 %v41, %v40
    %v43 = vadd.f32 %v38, %v42
    %s44 = sld [smem:[#allocation2 + $0x1]]
    %s45 = scalar_lea.vmem [#allocation6], 1
    %v46 = vld [vmem:[%s45] ss:$8 sm:$0x7]
    %v47 = vstv %s44
    %v48 = vmul.f32 %v47, %v46
    %v49 = vadd.f32 %v43, %v48
    %s50 = sld [smem:[#allocation2 + $0x2]]
    %s51 = scalar_lea.vmem [#allocation6], 2
    %v52 = vld [vmem:[%s51] ss:$8 sm:$0x7]
    %v53 = vstv %s50
    %v54 = vmul.f32 %v53, %v52
    %v55 = vadd.f32 %v49, %v54
    %s56 = sld [smem:[#allocation2 + $0x3]]
    %s57 = scalar_lea.vmem [#allocation6], 3
    %v58 = vld [vmem:[%s57] ss:$8 sm:$0x7]
    %v59 = vstv %s56
    %v60 = vmul.f32 %v59, %v58
    %v61 = vadd.f32 %v55, %v60
    %s62 = sld [smem:[#allocation2 + $0x4]]
    %s63 = scalar_lea.vmem [#allocation6], 4
    %v64 = vld [vmem:[%s63] ss:$8 sm:$0x7]
    %v65 = vstv %s62
    %v66 = vmul.f32 %v65, %v64
    %v67 = vadd.f32 %v61, %v66
    %v68 = vlaneseq
    %vm69 = vcmp.ge.s32.totalorder %v68, 0
    %vm70 = vcmp.lt.s32.totalorder %v68, 384
    %vm71 = vmand %vm69, %vm70
    %72 = vst.msk [vmem:[#allocation7] sm:$0x7] %vm71, %v67
    // Predicated region
    $region18: #{llmodel4_forward.1} parent=1 // pred_check
      _
    $region19: #{llmodel4_forward.1} parent=1 // pred_check_branch
      %74 = sbr.rel (0) target = $region21
    $region20: #{llmodel4_forward.1} parent=1 // pred_region
      %s76 = ssub.s32 48, 48
      %77 = vsyncadd [#allocation4], %s76
      %s79 = sshll.u32 [#allocation7], 4
      %s80 = int_to_ptr.vmem [resolvable:$true] %s79
      %82 = dma.vmem_to_hbm [thread:$0]  %s80, 48, %s2, [#allocation4]
    $region21: #{llmodel4_forward.1} parent=1 // pred_fallthru
      _
    // Predicated region
    $region22: #{llmodel4_forward.1} parent=1 // pred_check
      _
    $region23: #{llmodel4_forward.1} parent=1 // pred_check_branch
      %84 = sbr.rel (0) target = $region25
    $region24: #{llmodel4_forward.1} parent=1 // pred_region
      %85 = dma.done [#allocation4], 48
    $region25: #{llmodel4_forward.1} parent=1 // pred_fallthru
      _
    %86 = vsyncpa [#allocation3], 1
    %87 = vsyncpa [#allocation4], 1
    %88 = vsyncpa [#allocation5], 1

</llo_original>
